<compile_context>
chip_gen: v5e
topology: v5e:2x2
jax: 0.10.0
libtpu: 0.0.40
codegen_flags: <defaults>
</compile_context>

<pallas_src>
import jax
import jax.numpy as jnp
from jax.experimental import pallas as pl
from jax.experimental.pallas import tpu as pltpu


def _num_embed_kernel(x_ref, w_ref, o_ref):
    # x_ref: (TB, F)        scalar value of each numeric field for this tile
    # w_ref: (F, FE_pad)    block-diagonal embedding matrix (resident)
    # o_ref: (TB, FE_pad)   lane-dense flattened output tile
    o_ref[...] = jnp.dot(x_ref[...], w_ref[...],
                         preferred_element_type=jnp.float32)


def numerical_embedding(num, emb, *, tile_bytes=8 * 1024 * 1024):
    """num: (B, F, 1) float32, emb: (F, E) float32 -> (B, F, E) float32."""
    B, F, one = num.shape
    assert one == 1, "each numeric field is a scalar"
    Fe, E = emb.shape
    assert Fe == F

    FE = F * E
    FE_pad = ((FE + 127) // 128) * 128          # lane-dense output width

    x = jnp.squeeze(num, axis=-1).astype(jnp.float32)        # (B, F)

    # Block-diagonal weight: W[g, f*E + e] = (g == f) * emb[f, e]
    # so (x @ W)[b, f*E + e] = x[b, f] * emb[f, e].
    eye = jnp.eye(F, dtype=jnp.float32)
    W = (eye[:, :, None] * emb[None, :, :].astype(jnp.float32)).reshape(F, FE)
    if FE_pad != FE:
        W = jnp.pad(W, ((0, 0), (0, FE_pad - FE)))

    # Batch tile: largest TB (multiple of 8 for f32 sublanes, or TB == B) whose
    # output tile is ~tile_bytes; double-buffered this stays well under the
    # ~48 MiB VMEM budget that is safe on all of v5e / v6e / v7x.
    row_bytes = FE_pad * 4
    max_rows = max(8, tile_bytes // row_bytes)
    if B <= max_rows:
        TB = B                                   # whole batch in one tile
    else:
        TB = (max_rows // 8) * 8                 # multiple of 8 sublanes
    grid = (pl.cdiv(B, TB),)

    cost = pl.CostEstimate(
        flops=2 * B * F * FE_pad,
        transcendentals=0,
        bytes_accessed=4 * (B * FE_pad + B * F + F * FE_pad),
    )

    out_flat = pl.pallas_call(
        _num_embed_kernel,
        out_shape=jax.ShapeDtypeStruct((B, FE_pad), jnp.float32),
        grid=grid,
        in_specs=[
            pl.BlockSpec((TB, F), lambda i: (i, 0)),        # x: per-tile
            pl.BlockSpec((F, FE_pad), lambda i: (0, 0)),    # W: resident
        ],
        out_specs=pl.BlockSpec((TB, FE_pad), lambda i: (i, 0)),
        compiler_params=pltpu.CompilerParams(
            dimension_semantics=("parallel",),
            vmem_limit_bytes=48 * 1024 * 1024,
        ),
        cost_estimate=cost,
    )(x, W)

    if FE_pad != FE:
        out_flat = out_flat[:, :FE]
    return out_flat.reshape(B, F, E)


if __name__ == "__main__":
    B, num_features, embed_dim = 2, 4, 32

    key = jax.random.PRNGKey(0)
    k_emb, k_x = jax.random.split(key)

    # Deterministic parameter init mirroring torch.randn(1, embed_dim) * 0.01
    # for each of num_features fields, stacked into (F, E).
    emb = (jax.random.normal(k_emb, (num_features, embed_dim), dtype=jnp.float32)
           * 0.01)

    # Input numeric features: (B, num_fields, 1)
    num = jax.random.normal(k_x, (B, num_features, 1), dtype=jnp.float32)

    out = numerical_embedding(num, emb)
    out = jax.block_until_ready(out)

    # Pure-JAX reference of the PyTorch forward.
    ref = num * emb[None, :, :]          # (B, F, 1) * (1, F, E) -> (B, F, E)

    assert out.shape == (B, num_features, embed_dim)
    assert jnp.allclose(out, ref, atol=1e-6, rtol=1e-6)
    print("KERNEL_OK")
</pallas_src>

<mosaic_0001>
module attributes {stable_mosaic.version = 11 : i64} {
  func.func @_num_embed_kernel(%arg0: i32, %arg1: memref<2x4xf32, #tpu.memory_space<vmem>>, %arg2: memref<4x128xf32, #tpu.memory_space<vmem>>, %arg3: memref<2x128xf32, #tpu.memory_space<vmem>>) attributes {dimension_semantics = [#tpu.dimension_semantics<parallel>], iteration_bounds = array<i64: 1>, scalar_prefetch = 0 : i64, scratch_operands = 0 : i64, tpu.core_type = #tpu.core_type<tc>, window_params = [{transform_indices = @transform_0, window_bounds = array<i64: 2, 4>}, {pipeline_mode = #tpu.pipeline_mode<synchronous>, transform_indices = @transform_1, window_bounds = array<i64: 4, 128>}, {transform_indices = @transform_2, window_bounds = array<i64: 2, 128>}]} {
    %c0 = arith.constant 0 : index
    %c0_0 = arith.constant 0 : index
    %0 = vector.load %arg1[%c0, %c0_0] : memref<2x4xf32, #tpu.memory_space<vmem>>, vector<2x4xf32>
    %c0_1 = arith.constant 0 : index
    %c0_2 = arith.constant 0 : index
    %1 = vector.load %arg2[%c0_1, %c0_2] : memref<4x128xf32, #tpu.memory_space<vmem>>, vector<4x128xf32>
    %cst = arith.constant dense<0.000000e+00> : vector<2x128xf32>
    %2 = tpu.matmul %0, %1, %cst {dimension_numbers = #tpu.dot_dimension_numbers<[1], [0], [0], [1], [0, 0, 1, 1], [], []>} : vector<2x4xf32>, vector<4x128xf32>, vector<2x128xf32> -> vector<2x128xf32>
    %c0_3 = arith.constant 0 : index
    %c0_4 = arith.constant 0 : index
    %3 = vector.load %arg3[%c0_3, %c0_4] : memref<2x128xf32, #tpu.memory_space<vmem>>, vector<2x128xf32>
    tpu.vector_store %arg3[%c0_3, %c0_4], %2 {strides = array<i32>} : memref<2x128xf32, #tpu.memory_space<vmem>>, vector<2x128xf32>,
    return
  }
  func.func @transform_0(%arg0: i32) -> (i32, i32) {
    %c0_i32 = arith.constant 0 : i32
    %c0_i32_0 = arith.constant 0 : i32
    return %arg0, %c0_i32 : i32, i32
  }
  func.func @transform_1(%arg0: i32) -> (i32, i32) {
    %c0_i32 = arith.constant 0 : i32
    %c0_i32_0 = arith.constant 0 : i32
    %c0_i32_1 = arith.constant 0 : i32
    return %c0_i32, %c0_i32_0 : i32, i32
  }
  func.func @transform_2(%arg0: i32) -> (i32, i32) {
    %c0_i32 = arith.constant 0 : i32
    %c0_i32_0 = arith.constant 0 : i32
    return %arg0, %c0_i32 : i32, i32
  }
}

</mosaic_0001>

<llo_original>
// kernel: tpu_custom_call.1
$region0: #{tpu_custom_call.1}
  #allocation0 [shape = 'u32[]', space=smem, size = 0x4, offset = 0x4, fixed_abs, tag = 'smem constant byte address 0x4 - core index']
  #allocation1 [shape = 'u32[72,128]{1,0:T(1,128)}', space=vmem, size = 0x9000, scoped, tag = 'internal scratch']
  %s0 = inlined_call_operand.hbm [shape: f32[2,4], index: 0, kind: input, shape index: {}]
  %s1 = inlined_call_operand.hbm [shape: f32[4,128], index: 1, kind: input, shape index: {}]
  %s2 = inlined_call_operand.hbm [shape: f32[2,128], index: 2, kind: output, shape index: {}]
  %s3 = sld [smem:[#allocation0]]
  $region26: #{tpu_custom_call.1} parent=0
    _
  %s5 = ssub.s32 1, %s3
  %s6 = scalar_select 0, %s5, %s3
  $region1: #{tpu_custom_call.1} parent=0
    #allocation2 [shape = 'u8[1024]{0}', space=vmem, size = 0x400, scoped, tag = 'input window, operand 0, single buffered']
    #allocation3 [shape = 's32[1]{0}', space=sflag, size = 0x4, scoped, tag = 'scoped memory for tpu_custom_call.1']
    #allocation4 [shape = 's32[1]{0}', space=sflag, size = 0x4, scoped, tag = 'scoped memory for tpu_custom_call.1']
    #allocation5 [shape = 'u8[2048]{0}', space=vmem, size = 0x800, scoped, tag = 'input window, operand 1, single buffered']
    #allocation6 [shape = 's32[1]{0}', space=sflag, size = 0x4, scoped, tag = 'scoped memory for tpu_custom_call.1']
    #allocation7 [shape = 'u8[1024]{0}', space=vmem, size = 0x400, scoped, tag = 'output window, operand 0, single buffered']
    %7 = vsyncpa [#allocation3], 0
    %8 = vsyncpa [#allocation6], 0
    %9 = vsyncpa [#allocation4], 0
    // Predicated region
    $region2: #{tpu_custom_call.1} parent=1 // pred_check
      _
    $region3: #{tpu_custom_call.1} parent=1 // pred_check_branch
      %11 = sbr.rel (0) target = $region5
    $region4: #{tpu_custom_call.1} parent=1 // pred_region
      %13 = vsyncadd [#allocation3], 0
      %s15 = sshll.u32 %s0, 4
      %s16 = int_to_ptr.hbm [resolvable:$true] %s15
      %s17 = sshll.u32 [#allocation2], 4
      %s18 = int_to_ptr.vmem [resolvable:$true] %s17
      %20 = dma.hbm_to_vmem [thread:$0]  %s16, 32, %s18, [#allocation3]
    $region5: #{tpu_custom_call.1} parent=1 // pred_fallthru
      _
    // Predicated region
    $region6: #{tpu_custom_call.1} parent=1 // pred_check
      _
    $region7: #{tpu_custom_call.1} parent=1 // pred_check_branch
      %22 = sbr.rel (0) target = $region9
    $region8: #{tpu_custom_call.1} parent=1 // pred_region
      %24 = vsyncadd [#allocation6], 0
      %s26 = sshll.u32 %s1, 4
      %s27 = int_to_ptr.hbm [resolvable:$true] %s26
      %s28 = sshll.u32 [#allocation5], 4
      %s29 = int_to_ptr.vmem [resolvable:$true] %s28
      %31 = dma.hbm_to_vmem [thread:$0]  %s27, 64, %s29, [#allocation6]
    $region9: #{tpu_custom_call.1} parent=1 // pred_fallthru
      _
    // Predicated region
    $region10: #{tpu_custom_call.1} parent=1 // pred_check
      _
    $region11: #{tpu_custom_call.1} parent=1 // pred_check_branch
      %33 = sbr.rel (0) target = $region13
    $region12: #{tpu_custom_call.1} parent=1 // pred_region
      %35 = dma.done [#allocation3], 32
    $region13: #{tpu_custom_call.1} parent=1 // pred_fallthru
      _
    // Predicated region
    $region14: #{tpu_custom_call.1} parent=1 // pred_check
      _
    $region15: #{tpu_custom_call.1} parent=1 // pred_check_branch
      %37 = sbr.rel (0) target = $region17
    $region16: #{tpu_custom_call.1} parent=1 // pred_region
      %39 = dma.done [#allocation6], 64
    $region17: #{tpu_custom_call.1} parent=1 // pred_fallthru
      _
    %v40 = vld [vmem:[#allocation2] sm:$0x3]
    %v41 = vld [vmem:[#allocation5] sm:$0xf]
    %vm42 = vcmask 31744
    %v44 = vsel %vm42, %v40, 0
    %vm46 = vcmask 1043456
    %v48 = vsel %vm46, %v41, 0
    %50 = vmatpush.msra.mxu0 0.0
    %51 = vmatpush.msra.mxu0 0.0
    %52 = vmatpush.msra.mxu0 0.0
    %53 = vmatpush.msra.mxu0 0.0
    %54 = vmatpush.msra.mxu0 0.0
    %55 = vmatpush.msra.mxu0 0.0
    %56 = vmatpush.msra.mxu0 0.0
    %57 = vmatpush.msra.mxu0 0.0
    %58 = vmatpush.msra.mxu0 0.0
    %59 = vmatpush.msra.mxu0 0.0
    %60 = vmatpush.msra.mxu0 0.0
    %61 = vmatpush.msra.mxu0 0.0
    %62 = vmatpush.msra.mxu0 0.0
    %63 = vmatpush.msra.mxu0 0.0
    %64 = vmatpush.msra.mxu0 0.0
    %65 = vmatpush.msra.mxu0 %v48
    %66 = vmatmul.f32.gmra.mxu0 %v44
    %v67 = vpop.f32.mrf.mxu0
    %v68 = vadd.f32 0.0, %v67
    %69 = vdwg.mxu0
    %70 = vst [vmem:[#allocation7] sm:$0x3] %v68
    // Predicated region
    $region18: #{tpu_custom_call.1} parent=1 // pred_check
      _
    $region19: #{tpu_custom_call.1} parent=1 // pred_check_branch
      %72 = sbr.rel (0) target = $region21
    $region20: #{tpu_custom_call.1} parent=1 // pred_region
      %74 = vsyncadd [#allocation4], 0
      %s76 = sshll.u32 [#allocation7], 4
      %s77 = int_to_ptr.vmem [resolvable:$true] %s76
      %s78 = sshll.u32 %s2, 4
      %s79 = int_to_ptr.hbm [resolvable:$true] %s78
      %81 = dma.vmem_to_hbm [thread:$0]  %s77, 32, %s79, [#allocation4]
    $region21: #{tpu_custom_call.1} parent=1 // pred_fallthru
      _
    // Predicated region
    $region22: #{tpu_custom_call.1} parent=1 // pred_check
      _
    $region23: #{tpu_custom_call.1} parent=1 // pred_check_branch
      %83 = sbr.rel (0) target = $region25
    $region24: #{tpu_custom_call.1} parent=1 // pred_region
      %85 = dma.done [#allocation4], 32
    $region25: #{tpu_custom_call.1} parent=1 // pred_fallthru
      _
    %86 = vsyncpa [#allocation3], 1
    %87 = vsyncpa [#allocation6], 1
    %88 = vsyncpa [#allocation4], 1

</llo_original>
